<compile_context>
chip_gen: v7x
topology: tpu7x:2x2x1
jax: 0.10.0
libtpu: 0.0.40
codegen_flags: <defaults>
</compile_context>

<pallas_src>
import functools

import jax
import jax.numpy as jnp
from jax.experimental import pallas as pl
from jax.experimental.pallas import tpu as pltpu


def _ce_loss_kernel(logits_ref, target_ref, out_ref, m_sc, l_sc, t_sc,
                    *, scale, num_classes, class_tile, mask_classes):
    """Row-tile x class-tile streaming softmax cross-entropy."""
    ci = pl.program_id(1)
    last_ci = pl.num_programs(1) - 1

    @pl.when(ci == 0)
    def _init():
        m_sc[...] = jnp.full_like(m_sc, -jnp.inf)
        l_sc[...] = jnp.zeros_like(l_sc)
        t_sc[...] = jnp.zeros_like(t_sc)

    # Upcast to f32 for the streaming accumulators (required on v5e; cheap
    # elsewhere).  Feeding bf16 logits from HBM halves bytes read.
    x = logits_ref[...].astype(jnp.float32)                    # (TN, TC)

    # Tile-local class indices; the target is shifted into the tile frame with
    # a (TN,1) scalar-lane subtract instead of shifting the full-tile iota.
    col = jax.lax.broadcasted_iota(jnp.int32, x.shape, 1)      # (TN, TC)
    tgt_local = target_ref[...] - ci * class_tile              # (TN, 1)

    if mask_classes:
        # Only the last class tile can run past C; mask padded lanes there
        # only (the compare/select is skipped on every other class tile).
        rem = num_classes - ci * class_tile
        x = jax.lax.cond(
            ci == last_ci,
            lambda xv: jnp.where(col < rem, xv, -jnp.inf),
            lambda xv: xv,
            x,
        )

    # Streaming (online) logsumexp update.
    m_prev = m_sc[...]
    m_new = jnp.maximum(m_prev, jnp.max(x, axis=-1, keepdims=True))
    alpha = jnp.exp(m_prev - m_new)
    p = jnp.exp(x - m_new)
    l_sc[...] = alpha * l_sc[...] + jnp.sum(p, axis=-1, keepdims=True)
    m_sc[...] = m_new

    # Gather the logit at the target class (matches in exactly one class tile;
    # padded lanes of the last tile cannot match since valid targets < C).
    t_sc[...] += jnp.sum(jnp.where(col == tgt_local, x, 0.0), axis=-1,
                         keepdims=True)

    @pl.when(ci == last_ci)
    def _finalize():
        per = (m_sc[...] + jnp.log(l_sc[...])) - t_sc[...]
        if scale != 1.0:
            per = per * scale
        out_ref[...] = per.astype(out_ref.dtype)


_MAX_ROW_TILE = 1024
_MAX_CLASS_TILE = 8192     # lanes per class tile when streaming over C
_MIN_CLASS_TILE = 2048     # keep per-row DMA bursts wide (>= 8 KiB for f32)


def _round_up(x, m):
    return (x + m - 1) // m * m


def _row_multiple(dtype):
    itemsize = jnp.dtype(dtype).itemsize
    if itemsize >= 4:
        return 8
    if itemsize == 2:
        return 16
    return 32


def _vmem_capacity_bytes():
    try:
        return int(pltpu.get_tpu_info().vmem_capacity_bytes)
    except Exception:
        return 64 << 20   # conservative (v7x-sized) fallback


def _choose_tiles(n, c, row_mult, budget_elems):
    # Prefer a single class tile spanning all of C: single pass, widest
    # contiguous DMA rows, no streaming-state updates.
    tn_full = (budget_elems // max(1, c)) // row_mult * row_mult
    if tn_full >= row_mult:
        tc = c
        tn = min(_MAX_ROW_TILE, tn_full)
    else:
        # Stream over the class axis.  Pick a 128-multiple class tile that
        # divides C exactly when one exists (>= _MIN_CLASS_TILE) so the
        # masked-last-tile path is never taken for common vocab sizes.
        tc = 0
        cand = min(_MAX_CLASS_TILE, (c // 128) * 128)
        while cand >= _MIN_CLASS_TILE:
            if c % cand == 0:
                tc = cand
                break
            cand -= 128
        if tc == 0:
            tc = min(_MAX_CLASS_TILE, _round_up(c, 128))
        tn = (budget_elems // tc) // row_mult * row_mult
        tn = max(row_mult, min(_MAX_ROW_TILE, tn))

    # tn == n (the full dim) is always layout-legal.
    if tn >= n:
        tn = n
    # Ensure >= 2 row tiles when possible so the "parallel" row axis can be
    # split across v7x's two TensorCores (neutral on 1-TC v5e/v6e).
    if n > 2 * row_mult and pl.cdiv(n, tn) < 2:
        tn = _round_up(pl.cdiv(n, 2), row_mult)
    return tn, tc


def classification_loss(
    logits,
    target,
    *,
    num_classes,
    normed=True,
    norm_scale=2.0,
    loss_scale=0.5,
    reduction="mean",
    row_tile=None,
    class_tile=None,
):
    """Mirror of ClassificationLoss.forward with softmax-CE as the loss."""
    assert logits.ndim == 2 and logits.shape[1] == num_classes
    n, c = logits.shape

    # Base-class semantics: scale = (norm_scale if normed else 1) * loss_scale,
    # applied after the (reduced) loss; multiplicative so order-invariant.
    scale = float((norm_scale if normed else 1.0) * loss_scale)

    itemsize = jnp.dtype(logits.dtype).itemsize
    row_mult = _row_multiple(logits.dtype)

    vmem_cap = _vmem_capacity_bytes()
    # Generation-aware tile budget, in f32-equivalent elements (so in-kernel
    # f32 temporaries stay bounded for bf16 inputs too): larger tiles on
    # 128 MiB-VMEM parts (v5e/v6e), smaller on 64 MiB parts (v7x).
    budget_elems = (4 << 20) if vmem_cap >= (100 << 20) else (2 << 20)

    tn, tc = _choose_tiles(n, c, row_mult, budget_elems)
    if row_tile is not None:
        assert row_tile == n or row_tile % row_mult == 0, row_tile
        tn = row_tile
    if class_tile is not None:
        assert class_tile == c or class_tile % 128 == 0, class_tile
        tc = class_tile
    mask_classes = (c % tc) != 0

    grid = (pl.cdiv(n, tn), pl.cdiv(c, tc))
    target2d = target.astype(jnp.int32).reshape(n, 1)

    # VMEM allowance: 2x double-buffered logits tile (input dtype) + headroom
    # for the kernel's f32 temporaries, clamped to the chip's capacity.
    buf_bytes = 2 * tn * tc * itemsize
    tmp_bytes = 3 * tn * tc * 4
    vmem_limit = int(min(max(buf_bytes + tmp_bytes + (2 << 20), 32 << 20),
                         max(vmem_cap - (8 << 20), 32 << 20)))

    kernel = functools.partial(
        _ce_loss_kernel,
        scale=scale,
        num_classes=c,
        class_tile=tc,
        mask_classes=mask_classes,
    )

    per = pl.pallas_call(
        kernel,
        out_shape=jax.ShapeDtypeStruct((n, 1), jnp.float32),
        grid=grid,
        in_specs=[
            pl.BlockSpec((tn, tc), lambda i, ci: (i, ci)),   # logits tile
            pl.BlockSpec((tn, 1), lambda i, ci: (i, 0)),     # targets (tiny)
        ],
        out_specs=pl.BlockSpec((tn, 1), lambda i, ci: (i, 0)),
        scratch_shapes=[
            pltpu.VMEM((tn, 1), jnp.float32),   # running max
            pltpu.VMEM((tn, 1), jnp.float32),   # running sum(exp)
            pltpu.VMEM((tn, 1), jnp.float32),   # target logit
        ],
        compiler_params=pltpu.CompilerParams(
            dimension_semantics=("parallel", "arbitrary"),
            vmem_limit_bytes=vmem_limit,
        ),
    )(logits, target2d)

    per = per[:, 0]
    if reduction == "mean":
        return jnp.mean(per)
    if reduction == "sum":
        return jnp.sum(per)
    return per   # 'none'


def _reference(logits, target, *, scale, reduction):
    x = logits.astype(jnp.float32)
    lse = jax.nn.logsumexp(x, axis=-1)
    tgt = jnp.take_along_axis(x, target[:, None].astype(jnp.int32), axis=-1)[:, 0]
    per = lse - tgt
    if reduction == "mean":
        per = jnp.mean(per)
    elif reduction == "sum":
        per = jnp.sum(per)
    return per * scale


if __name__ == "__main__":
    key = jax.random.PRNGKey(0)
    k1, k2, k3, k4, k5, k6 = jax.random.split(key, 6)

    # 1) Module-consistent small shapes: batch=8, num_classes=32 (f32, mean).
    batch, num_classes = 8, 32
    logits = jax.random.normal(k1, (batch, num_classes), dtype=jnp.float32)
    target = jax.random.randint(k2, (batch,), 0, num_classes, dtype=jnp.int32)
    out = classification_loss(
        logits, target, num_classes=num_classes,
        normed=True, norm_scale=2.0, loss_scale=0.5, reduction="mean",
    )
    out = jax.block_until_ready(out)
    ref = _reference(logits, target, scale=1.0, reduction="mean")  # 2.0*0.5 = 1
    assert jnp.allclose(out, ref, atol=1e-5, rtol=1e-5), (out, ref)

    # 2) Streaming class tiles + masked (uneven) last class tile + partial row
    #    tiles; exercises the lax.cond last-tile-only masking path.
    n2, c2 = 40, 200
    logits2 = jax.random.normal(k3, (n2, c2), dtype=jnp.float32)
    target2 = jax.random.randint(k4, (n2,), 0, c2, dtype=jnp.int32)
    out2 = classification_loss(
        logits2, target2, num_classes=c2,
        normed=False, norm_scale=2.0, loss_scale=0.25, reduction="none",
        row_tile=16, class_tile=128,
    )
    out2 = jax.block_until_ready(out2)
    ref2 = _reference(logits2, target2, scale=0.25, reduction="none")
    assert jnp.allclose(out2, ref2, atol=1e-4, rtol=1e-4), (out2, ref2)

    # 3) bf16 logits path (halves HBM bytes; compute upcast to f32 in-kernel,
    #    row tile rounded to the bf16 packed sublane multiple of 16).
    n3, c3 = 32, 256
    logits3 = jax.random.normal(k5, (n3, c3), dtype=jnp.float32).astype(jnp.bfloat16)
    target3 = jax.random.randint(k6, (n3,), 0, c3, dtype=jnp.int32)
    out3 = classification_loss(
        logits3, target3, num_classes=c3,
        normed=True, norm_scale=2.0, loss_scale=0.5, reduction="sum",
    )
    out3 = jax.block_until_ready(out3)
    ref3 = _reference(logits3, target3, scale=1.0, reduction="sum")
    assert jnp.allclose(out3, ref3, atol=1e-3, rtol=1e-3), (out3, ref3)

    print("KERNEL_OK")
</pallas_src>

<mosaic_0001>
module attributes {stable_mosaic.version = 11 : i64} {
  func.func @_ce_loss_kernel(%arg0: i32, %arg1: i32, %arg2: memref<8x32xf32, #tpu.memory_space<vmem>>, %arg3: memref<8x1xi32, #tpu.memory_space<vmem>>, %arg4: memref<8x1xf32, #tpu.memory_space<vmem>>, %arg5: memref<8x1xf32, #tpu.memory_space<vmem>>, %arg6: memref<8x1xf32, #tpu.memory_space<vmem>>, %arg7: memref<8x1xf32, #tpu.memory_space<vmem>>) attributes {dimension_semantics = [#tpu.dimension_semantics<parallel>, #tpu.dimension_semantics<arbitrary>], iteration_bounds = array<i64: 1, 1>, scalar_prefetch = 0 : i64, scratch_operands = 3 : i64, tpu.core_type = #tpu.core_type<tc>, window_params = [{transform_indices = @transform_0, window_bounds = array<i64: 8, 32>}, {transform_indices = @transform_1, window_bounds = array<i64: 8, 1>}, {transform_indices = @transform_2, window_bounds = array<i64: 8, 1>}]} {
    %c0_i32 = arith.constant 0 : i32
    %0 = arith.cmpi eq, %arg1, %c0_i32 : i32
    %1 = arith.extui %0 : i1 to i32
    %c0_i32_0 = arith.constant 0 : i32
    %2 = arith.cmpi ne, %1, %c0_i32_0 : i32
    scf.if %2 {
      %cst_21 = arith.constant 0xFF800000 : f32
      %37 = vector.broadcast %cst_21 : f32 to vector<8x1xf32>
      %c0_22 = arith.constant 0 : index
      %c0_23 = arith.constant 0 : index
      %38 = vector.load %arg5[%c0_22, %c0_23] : memref<8x1xf32, #tpu.memory_space<vmem>>, vector<8x1xf32>
      tpu.vector_store %arg5[%c0_22, %c0_23], %37 {strides = array<i32>} : memref<8x1xf32, #tpu.memory_space<vmem>>, vector<8x1xf32>,
      %cst_24 = arith.constant 0.000000e+00 : f32
      %39 = vector.broadcast %cst_24 : f32 to vector<8x1xf32>
      %c0_25 = arith.constant 0 : index
      %c0_26 = arith.constant 0 : index
      %40 = vector.load %arg6[%c0_25, %c0_26] : memref<8x1xf32, #tpu.memory_space<vmem>>, vector<8x1xf32>
      tpu.vector_store %arg6[%c0_25, %c0_26], %39 {strides = array<i32>} : memref<8x1xf32, #tpu.memory_space<vmem>>, vector<8x1xf32>,
      %cst_27 = arith.constant 0.000000e+00 : f32
      %41 = vector.broadcast %cst_27 : f32 to vector<8x1xf32>
      %c0_28 = arith.constant 0 : index
      %c0_29 = arith.constant 0 : index
      %42 = vector.load %arg7[%c0_28, %c0_29] : memref<8x1xf32, #tpu.memory_space<vmem>>, vector<8x1xf32>
      tpu.vector_store %arg7[%c0_28, %c0_29], %41 {strides = array<i32>} : memref<8x1xf32, #tpu.memory_space<vmem>>, vector<8x1xf32>,
    } else {
    }
    %c0 = arith.constant 0 : index
    %c0_1 = arith.constant 0 : index
    %3 = vector.load %arg2[%c0, %c0_1] : memref<8x32xf32, #tpu.memory_space<vmem>>, vector<8x32xf32>
    %4 = tpu.iota {dimensions = array<i32: 1>} : vector<8x32xi32>
    %c0_2 = arith.constant 0 : index
    %c0_3 = arith.constant 0 : index
    %5 = vector.load %arg3[%c0_2, %c0_3] : memref<8x1xi32, #tpu.memory_space<vmem>>, vector<8x1xi32>
    %c32_i32 = arith.constant 32 : i32
    %6 = arith.muli %arg1, %c32_i32 : i32
    %7 = vector.broadcast %6 : i32 to vector<8x1xi32>
    %8 = arith.subi %5, %7 : vector<8x1xi32>
    %c0_4 = arith.constant 0 : index
    %c0_5 = arith.constant 0 : index
    %9 = vector.load %arg5[%c0_4, %c0_5] : memref<8x1xf32, #tpu.memory_space<vmem>>, vector<8x1xf32>
    %cst = arith.constant dense<0xFF800000> : vector<8xf32>
    %10 = vector.multi_reduction <maximumf>, %3, %cst [1] : vector<8x32xf32> to vector<8xf32>
    %11 = vector.shape_cast %10 : vector<8xf32> to vector<8x1xf32>
    %12 = arith.maximumf %9, %11 : vector<8x1xf32>
    %13 = arith.subf %9, %12 : vector<8x1xf32>
    %14 = math.exp %13 : vector<8x1xf32>
    %15 = vector.broadcast %12 : vector<8x1xf32> to vector<8x32xf32>
    %16 = arith.subf %3, %15 : vector<8x32xf32>
    %17 = math.exp %16 : vector<8x32xf32>
    %c0_6 = arith.constant 0 : index
    %c0_7 = arith.constant 0 : index
    %18 = vector.load %arg6[%c0_6, %c0_7] : memref<8x1xf32, #tpu.memory_space<vmem>>, vector<8x1xf32>
    %19 = arith.mulf %14, %18 : vector<8x1xf32>
    %cst_8 = arith.constant dense<0.000000e+00> : vector<8xf32>
    %20 = vector.multi_reduction <add>, %17, %cst_8 [1] : vector<8x32xf32> to vector<8xf32>
    %21 = vector.shape_cast %20 : vector<8xf32> to vector<8x1xf32>
    %22 = arith.addf %19, %21 : vector<8x1xf32>
    %c0_9 = arith.constant 0 : index
    %c0_10 = arith.constant 0 : index
    %23 = vector.load %arg6[%c0_9, %c0_10] : memref<8x1xf32, #tpu.memory_space<vmem>>, vector<8x1xf32>
    tpu.vector_store %arg6[%c0_9, %c0_10], %22 {strides = array<i32>} : memref<8x1xf32, #tpu.memory_space<vmem>>, vector<8x1xf32>,
    %c0_11 = arith.constant 0 : index
    %c0_12 = arith.constant 0 : index
    %24 = vector.load %arg5[%c0_11, %c0_12] : memref<8x1xf32, #tpu.memory_space<vmem>>, vector<8x1xf32>
    tpu.vector_store %arg5[%c0_11, %c0_12], %12 {strides = array<i32>} : memref<8x1xf32, #tpu.memory_space<vmem>>, vector<8x1xf32>,
    %c0_13 = arith.constant 0 : index
    %c0_14 = arith.constant 0 : index
    %25 = vector.load %arg7[%c0_13, %c0_14] : memref<8x1xf32, #tpu.memory_space<vmem>>, vector<8x1xf32>
    %26 = vector.broadcast %8 : vector<8x1xi32> to vector<8x32xi32>
    %27 = arith.cmpi eq, %4, %26 : vector<8x32xi32>
    %cst_15 = arith.constant 0.000000e+00 : f32
    %28 = vector.broadcast %cst_15 : f32 to vector<8x32xf32>
    %29 = arith.select %27, %3, %28 : vector<8x32xi1>, vector<8x32xf32>
    %cst_16 = arith.constant dense<0.000000e+00> : vector<8xf32>
    %30 = vector.multi_reduction <add>, %29, %cst_16 [1] : vector<8x32xf32> to vector<8xf32>
    %31 = vector.shape_cast %30 : vector<8xf32> to vector<8x1xf32>
    %32 = arith.addf %25, %31 : vector<8x1xf32>
    %c0_17 = arith.constant 0 : index
    %c0_18 = arith.constant 0 : index
    %33 = vector.load %arg7[%c0_17, %c0_18] : memref<8x1xf32, #tpu.memory_space<vmem>>, vector<8x1xf32>
    tpu.vector_store %arg7[%c0_17, %c0_18], %32 {strides = array<i32>} : memref<8x1xf32, #tpu.memory_space<vmem>>, vector<8x1xf32>,
    %c0_i32_19 = arith.constant 0 : i32
    %34 = arith.cmpi eq, %arg1, %c0_i32_19 : i32
    %35 = arith.extui %34 : i1 to i32
    %c0_i32_20 = arith.constant 0 : i32
    %36 = arith.cmpi ne, %35, %c0_i32_20 : i32
    scf.if %36 {
      %c0_21 = arith.constant 0 : index
      %c0_22 = arith.constant 0 : index
      %37 = vector.load %arg5[%c0_21, %c0_22] : memref<8x1xf32, #tpu.memory_space<vmem>>, vector<8x1xf32>
      %c0_23 = arith.constant 0 : index
      %c0_24 = arith.constant 0 : index
      %38 = vector.load %arg6[%c0_23, %c0_24] : memref<8x1xf32, #tpu.memory_space<vmem>>, vector<8x1xf32>
      %39 = math.log %38 : vector<8x1xf32>
      %40 = arith.addf %37, %39 : vector<8x1xf32>
      %c0_25 = arith.constant 0 : index
      %c0_26 = arith.constant 0 : index
      %41 = vector.load %arg7[%c0_25, %c0_26] : memref<8x1xf32, #tpu.memory_space<vmem>>, vector<8x1xf32>
      %42 = arith.subf %40, %41 : vector<8x1xf32>
      %c0_27 = arith.constant 0 : index
      %c0_28 = arith.constant 0 : index
      %43 = vector.load %arg4[%c0_27, %c0_28] : memref<8x1xf32, #tpu.memory_space<vmem>>, vector<8x1xf32>
      tpu.vector_store %arg4[%c0_27, %c0_28], %42 {strides = array<i32>} : memref<8x1xf32, #tpu.memory_space<vmem>>, vector<8x1xf32>,
    } else {
    }
    return
  }
  func.func @transform_0(%arg0: i32, %arg1: i32) -> (i32, i32) {
    %c0_i32 = arith.constant 0 : i32
    return %arg0, %arg1 : i32, i32
  }
  func.func @transform_1(%arg0: i32, %arg1: i32) -> (i32, i32) {
    %c0_i32 = arith.constant 0 : i32
    %c0_i32_0 = arith.constant 0 : i32
    return %arg0, %c0_i32 : i32, i32
  }
  func.func @transform_2(%arg0: i32, %arg1: i32) -> (i32, i32) {
    %c0_i32 = arith.constant 0 : i32
    %c0_i32_0 = arith.constant 0 : i32
    return %arg0, %c0_i32 : i32, i32
  }
}

</mosaic_0001>

<llo_original>
// kernel: tpu_custom_call.1
$region0: #{tpu_custom_call.1}
  #allocation0 [shape = 'u32[]', space=smem, size = 0x4, offset = 0x4, fixed_abs, tag = 'smem constant byte address 0x4 - core index']
  #allocation1 [shape = 'u32[144,128]{1,0:T(1,128)}', space=vmem, size = 0x12000, scoped, tag = 'internal scratch']
  #allocation2 [shape = 'f32[8,1]{1,0:T(8,128)}', space=vmem, size = 0x1000, scoped, tag = 'scratch operand']
  #allocation3 [shape = 'f32[8,1]{1,0:T(8,128)}', space=vmem, size = 0x1000, scoped, tag = 'scratch operand']
  #allocation4 [shape = 'f32[8,1]{1,0:T(8,128)}', space=vmem, size = 0x1000, scoped, tag = 'scratch operand']
  %s0 = inlined_call_operand.vmem [shape: f32[8,32], index: 0, kind: input, shape index: {}]
  %s1 = inlined_call_operand.vmem [shape: s32[8,1], index: 1, kind: input, shape index: {}]
  %s2 = inlined_call_operand.vmem [shape: f32[8,1], index: 2, kind: output, shape index: {}]
  %s3 = sld [smem:[#allocation0]]
  $region26: #{tpu_custom_call.1} parent=0
    _
  %s5 = ssub.s32 1, %s3
  %s6 = scalar_select 0, %s5, %s3
  // Predicated region
  $region2: #{tpu_custom_call.1} parent=0 // pred_check
    _
  $region3: #{tpu_custom_call.1} parent=0 // pred_check_branch
    %8 = sbr.rel (0) target = $region5
  $region4: #{tpu_custom_call.1} parent=0 // pred_region
    _
  $region5: #{tpu_custom_call.1} parent=0 // pred_fallthru
    _
  // Predicated region
  $region6: #{tpu_custom_call.1} parent=0 // pred_check
    _
  $region7: #{tpu_custom_call.1} parent=0 // pred_check_branch
    %10 = sbr.rel (0) target = $region9
  $region8: #{tpu_custom_call.1} parent=0 // pred_region
    _
  $region9: #{tpu_custom_call.1} parent=0 // pred_fallthru
    _
  %p11 = scmp.eq.s32.totalorder 0, 0
  // Predicated region
  $region10: #{tpu_custom_call.1} parent=0 // pred_check
    %p12 = pneg %p11
  $region11: #{tpu_custom_call.1} parent=0 // pred_check_branch
    %14 = sbr.rel (%p12) target = $region13
  $region12: #{tpu_custom_call.1} parent=0 // pred_region
    %vm15 = vcmask 7168
    %16 = vst.msk [vmem:[#allocation2] sm:$0xff] %vm15, -inf
    %17 = vst.msk [vmem:[#allocation3] sm:$0xff] %vm15, 0.0
    %18 = vst.msk [vmem:[#allocation4] sm:$0xff] %vm15, 0.0
  $region13: #{tpu_custom_call.1} parent=0 // pred_fallthru
    _
  %v19 = vld [vmem:[%s0] sm:$0xff]
  %v20 = vlaneseq
  %v21 = vand.u32 %v20, 127
  %v22 = vld [vmem:[%s1] sm:$0xff]
  %s23 = smul.u32 0, 32
  %v24 = vstv %s23
  %v25 = vsub.s32 %v22, %v24
  %v26 = vld [vmem:[#allocation2] sm:$0xff]
  %vm27 = vcmask 261120
  %v28 = vsel %vm27, %v19, -inf
  %29 = vmax.xlane.f32.xlu0 %v28
  %v30 = vpop.xlane.xlu0 %29
  %v31 = vmax.f32 %v26, %v30
  %v32 = vsub.f32 %v26, %v31
  %v33 = vmul.f32 %v32, 1.442695
  %v34 = vpow.pop %v33
  %36 = vset.pattern.permute.xlu0 0
  %37 = vperm.xlu0 %36, %v31
  %v38 = vpop.permute.xlu0 %37
  %v40 = vsub.f32 %v19, %v38
  %v41 = vmul.f32 %v40, 1.442695
  %v42 = vpow.pop %v41
  %v43 = vld [vmem:[#allocation3] sm:$0xff]
  %v44 = vmul.f32 %v34, %v43
  %v45 = vsel %vm27, %v42, 0.0
  %46 = vadd.xlane.f32.xlu0 %v45
  %v47 = vpop.xlane.xlu0 %46
  %v48 = vadd.f32 %v44, %v47
  %vm49 = vcmask 7168
  %50 = vst.msk [vmem:[#allocation3] sm:$0xff] %vm49, %v48
  %51 = vst.msk [vmem:[#allocation2] sm:$0xff] %vm49, %v31
  %v52 = vld [vmem:[#allocation4] sm:$0xff]
  %53 = vset.pattern.permute.xlu0 0
  %54 = vperm.xlu0 %53, %v25
  %v55 = vpop.permute.xlu0 %54
  %vm56 = vcmp.eq.s32.totalorder %v21, %v55
  %v57 = vsel %vm56, %v19, 0.0
  %v58 = vsel %vm27, %v57, 0.0
  %59 = vadd.xlane.f32.xlu0 %v58
  %v60 = vpop.xlane.xlu0 %59
  %v61 = vadd.f32 %v52, %v60
  %62 = vst.msk [vmem:[#allocation4] sm:$0xff] %vm49, %v61
  // Predicated region
  $region14: #{tpu_custom_call.1} parent=0 // pred_check
    %p63 = pneg %p11
  $region15: #{tpu_custom_call.1} parent=0 // pred_check_branch
    %65 = sbr.rel (%p63) target = $region17
  $region16: #{tpu_custom_call.1} parent=0 // pred_region
    %v66 = vld [vmem:[#allocation2] sm:$0xff]
    %v67 = vld [vmem:[#allocation3] sm:$0xff]
    %v68 = vlog2.pop %v67
    %v69 = vmul.f32 %v68, 0.6931472
    %v70 = vadd.f32 %v66, %v69
    %v71 = vld [vmem:[#allocation4] sm:$0xff]
    %v72 = vsub.f32 %v70, %v71
    %73 = vst.msk [vmem:[%s2] sm:$0xff] %vm49, %v72
  $region17: #{tpu_custom_call.1} parent=0 // pred_fallthru
    _
  // Predicated region
  $region18: #{tpu_custom_call.1} parent=0 // pred_check
    _
  $region19: #{tpu_custom_call.1} parent=0 // pred_check_branch
    %75 = sbr.rel (0) target = $region21
  $region20: #{tpu_custom_call.1} parent=0 // pred_region
    _
  $region21: #{tpu_custom_call.1} parent=0 // pred_fallthru
    _
  // Predicated region
  $region22: #{tpu_custom_call.1} parent=0 // pred_check
    _
  $region23: #{tpu_custom_call.1} parent=0 // pred_check_branch
    %77 = sbr.rel (0) target = $region25
  $region24: #{tpu_custom_call.1} parent=0 // pred_region
    _
  $region25: #{tpu_custom_call.1} parent=0 // pred_fallthru
    _

</llo_original>
